<compile_context>
chip_gen: v5e
topology: v5e:2x2
jax: 0.10.0
libtpu: 0.0.40
codegen_flags: <defaults>
</compile_context>

<pallas_src>
import jax
import jax.numpy as jnp
from jax.experimental import pallas as pl
from jax.experimental.pallas import tpu as pltpu


# ----------------------------- Pallas kernel ------------------------------ #

def _aug8_kernel(v_ref, o_ref):
    """v_ref: [TR, 128] with x,y interleaved along lanes; o_ref: [8, TR, 128]."""
    v = v_ref[...]
    one = jnp.ones((), dtype=v.dtype)
    w = one - v                                   # (1-x, 1-y) interleaved

    lane = jax.lax.broadcasted_iota(jnp.int32, v.shape, 1)
    is_x = (lane & 1) == 0                        # even lanes hold x, odd hold y

    # Pairwise swap (x_i, y_i) -> (y_i, x_i): even lanes take their right
    # neighbour, odd lanes their left neighbour.  With C = 128 (even) these
    # are pure intra-vreg single-op lane rotates on the XLU.
    c = v.shape[-1]
    left = pltpu.roll(v, shift=1, axis=1)         # left[i]  = v[i-1]
    right = pltpu.roll(v, shift=c - 1, axis=1)    # right[i] = v[i+1]
    s = jnp.where(is_x, right, left)              # (y, x) interleaved
    t = one - s                                   # (1-y, 1-x) interleaved

    o_ref[0] = v                                  # (x,   y)
    o_ref[1] = jnp.where(is_x, w, v)              # (1-x, y)
    o_ref[2] = jnp.where(is_x, v, w)              # (x,   1-y)
    o_ref[3] = w                                  # (1-x, 1-y)
    o_ref[4] = s                                  # (y,   x)
    o_ref[5] = jnp.where(is_x, t, s)              # (1-y, x)
    o_ref[6] = jnp.where(is_x, s, t)              # (y,   1-x)
    o_ref[7] = t                                  # (1-y, 1-x)


# ------------------------------ wrappers ----------------------------------- #

_LANES = 128
_MIN_KERNEL_ELEMS = 1024      # below this, Pallas launch overhead dominates
_SUBLANE_MULT = 32            # safe row-tile multiple for 4/2/1-byte dtypes


def _round_up(x: int, m: int) -> int:
    return ((x + m - 1) // m) * m


def _vmem_capacity_bytes() -> int:
    try:
        return int(pltpu.get_tpu_info().vmem_capacity_bytes)
    except Exception:
        return 64 * 1024 * 1024   # conservative default (v7x-sized)


def _pick_tiling(R: int, dtype_size: int):
    """Return (row_tile, vmem_limit_bytes) for the current chip."""
    vmem = _vmem_capacity_bytes()
    if vmem >= 100 * 1024 * 1024:
        # v5e / v6e: 128 MiB physical VMEM, single TensorCore.  Big tiles
        # amortize the ~0.35 us/step pipeline overhead (pure HBM-write roofline).
        tile_cap_bytes = 5 * 1024 * 1024 // 2     # 2.5 MiB input tile (~45 MiB in flight)
        vmem_limit = 80 * 1024 * 1024
        min_steps = 1
    else:
        # v7x: 64 MiB VMEM per TC, 2 TCs.  Keep the (in + 8x out, double
        # buffered ~18x) working set inside VMEM and give the "parallel" grid
        # at least ~4 steps so both TensorCores get blocks.
        tile_cap_bytes = 5 * 1024 * 1024 // 4     # 1.25 MiB input tile (~23 MiB in flight)
        vmem_limit = 44 * 1024 * 1024
        min_steps = 4

    cap = max(_SUBLANE_MULT,
              (tile_cap_bytes // (dtype_size * _LANES)) // _SUBLANE_MULT * _SUBLANE_MULT)
    if min_steps > 1 and R >= min_steps * _SUBLANE_MULT:
        cap = min(cap, _round_up(pl.cdiv(R, min_steps), _SUBLANE_MULT))

    if R <= cap:
        return R, vmem_limit              # single full-extent block
    # Prefer a tile that divides R exactly -> no masked partial last block.
    for tr in range(cap, _SUBLANE_MULT - 1, -_SUBLANE_MULT):
        if R % tr == 0:
            return tr, vmem_limit
    return cap, vmem_limit                # ragged tail; Pallas masks OOB rows


def _aug8_reference(xy: jax.Array) -> jax.Array:
    """Pure-JAX reference / fallback, matches the PyTorch function exactly."""
    x = xy[..., 0:1]
    y = xy[..., 1:2]
    one = jnp.asarray(1, dtype=xy.dtype)
    zs = [
        jnp.concatenate([x, y], axis=2),
        jnp.concatenate([one - x, y], axis=2),
        jnp.concatenate([x, one - y], axis=2),
        jnp.concatenate([one - x, one - y], axis=2),
        jnp.concatenate([y, x], axis=2),
        jnp.concatenate([one - y, x], axis=2),
        jnp.concatenate([y, one - x], axis=2),
        jnp.concatenate([one - y, one - x], axis=2),
    ]
    return jnp.concatenate(zs, axis=0)


def augment_xy_data_by_8_fold(xy: jax.Array) -> jax.Array:
    """xy: [B, N, 2] -> [8*B, N, 2], same semantics as the PyTorch function."""
    B, N, two = xy.shape
    assert two == 2
    total = B * N * 2
    if total < _MIN_KERNEL_ELEMS:
        # Tiny inputs (e.g. 'depot'): plain-JAX path, launch overhead not worth it.
        return _aug8_reference(xy)

    # Flat, lane-dense view: x,y interleaved along 128-wide lanes.  If the
    # total is not a multiple of 128, zero-pad the END of the flat stream
    # only (an even prefix length -> x/y lane parity is preserved).
    pad = (-total) % _LANES
    flat = xy.reshape(total)
    if pad:
        flat = jnp.concatenate([flat, jnp.zeros((pad,), dtype=xy.dtype)])
    padded = total + pad
    R = padded // _LANES
    v = flat.reshape(R, _LANES)

    dtype_size = jnp.dtype(xy.dtype).itemsize
    tr, vmem_limit = _pick_tiling(R, dtype_size)
    grid = (pl.cdiv(R, tr),)

    out = pl.pallas_call(
        _aug8_kernel,
        out_shape=jax.ShapeDtypeStruct((8, R, _LANES), xy.dtype),
        grid=grid,
        in_specs=[pl.BlockSpec((tr, _LANES), lambda i: (i, 0))],
        out_specs=pl.BlockSpec((8, tr, _LANES), lambda i: (0, i, 0)),
        compiler_params=pltpu.CompilerParams(
            dimension_semantics=("parallel",),
            vmem_limit_bytes=vmem_limit,
        ),
        cost_estimate=pl.CostEstimate(
            flops=6 * padded,
            transcendentals=0,
            bytes_accessed=9 * padded * dtype_size,
        ),
    )(v)

    if pad:
        # TODO(synk): verify in the HLO that this trailing slice fuses into the
        # consumer; if it re-materializes the 8x slab, switch to a masked
        # partial last block instead of end-padding.
        out = out.reshape(8, padded)[:, :total]
    # Free reshape: flat order already matches torch.cat((z0..z7), dim=0).
    return out.reshape(8 * B, N, 2)


def env_aug_feats(env_name: str):
    return ("locs", "depot") if env_name == "op" else ("locs",)


def _batchify(arr: jax.Array, n: int) -> jax.Array:
    """rl4co batchify: repeat the whole batch n times along dim 0 (single copy)."""
    return jnp.broadcast_to(arr[None], (n,) + arr.shape).reshape(
        (n * arr.shape[0],) + arr.shape[1:]
    )


class StateAugmentation:
    """JAX/Pallas port of rl4co's POMO StateAugmentation.

    `td` is represented as a plain dict of arrays whose leading dim is batch.
    """

    def __init__(self, env_name: str, num_augment: int = 8):
        assert num_augment == 8, "Only 8 fold augmentation is supported for POMO"
        self.num_augment = num_augment
        self.augmentation = augment_xy_data_by_8_fold
        self.feats = env_aug_feats(env_name)

    def __call__(self, td: dict) -> dict:
        td_aug = {k: _batchify(v, self.num_augment) for k, v in td.items()}
        for feat in self.feats:
            x = td[feat]
            if x.ndim == 2:  # e.g. 'depot' of shape [B, 2]
                td_aug[feat] = self.augmentation(x[:, None, :])[:, 0, :]
            else:
                td_aug[feat] = self.augmentation(x)
        return td_aug


# ------------------------------- demo -------------------------------------- #

if __name__ == "__main__":
    key = jax.random.PRNGKey(0)
    k_locs, k_prize, k_locs2 = jax.random.split(key, 3)

    # Case 1: 128-aligned total -> direct Pallas path.
    B, N = 8, 64
    locs = jax.random.uniform(k_locs, (B, N, 2), dtype=jnp.float32)
    prize = jax.random.uniform(k_prize, (B, N), dtype=jnp.float32)  # non-aug feat
    td = {"locs": locs, "prize": prize}

    aug = StateAugmentation(env_name="tsp", num_augment=8)
    td_aug = aug(td)
    jax.block_until_ready(td_aug["locs"])

    ref_locs = _aug8_reference(locs)
    assert td_aug["locs"].shape == (8 * B, N, 2)
    assert td_aug["prize"].shape == (8 * B, N)
    assert jnp.allclose(td_aug["locs"], ref_locs, atol=1e-6)
    assert jnp.allclose(td_aug["prize"], jnp.tile(prize, (8, 1)))

    # Case 2: 128-UNaligned total (N=100) -> padded Pallas path.
    B2, N2 = 8, 100
    locs2 = jax.random.uniform(k_locs2, (B2, N2, 2), dtype=jnp.float32)
    aug_locs2 = augment_xy_data_by_8_fold(locs2)
    jax.block_until_ready(aug_locs2)
    assert aug_locs2.shape == (8 * B2, N2, 2)
    assert jnp.allclose(aug_locs2, _aug8_reference(locs2), atol=1e-6)

    # Case 3: 'op' env also augments the depot (tiny shape -> pure-JAX fallback).
    td_op = {"locs": locs, "depot": locs[:, 0, :], "prize": prize}
    aug_op = StateAugmentation(env_name="op", num_augment=8)
    td_op_aug = aug_op(td_op)
    jax.block_until_ready(td_op_aug["depot"])
    ref_depot = _aug8_reference(locs[:, 0:1, :])[:, 0, :]
    assert td_op_aug["depot"].shape == (8 * B, 2)
    assert jnp.allclose(td_op_aug["depot"], ref_depot, atol=1e-6)
    assert jnp.allclose(td_op_aug["locs"], ref_locs, atol=1e-6)

    print("KERNEL_OK")
</pallas_src>

<mosaic_0001>
module attributes {stable_mosaic.version = 11 : i64} {
  func.func @_aug8_kernel(%arg0: i32, %arg1: memref<8x128xf32, #tpu.memory_space<vmem>>, %arg2: memref<8x8x128xf32, #tpu.memory_space<vmem>>) attributes {dimension_semantics = [#tpu.dimension_semantics<parallel>], iteration_bounds = array<i64: 1>, scalar_prefetch = 0 : i64, scratch_operands = 0 : i64, tpu.core_type = #tpu.core_type<tc>, window_params = [{transform_indices = @transform_0, window_bounds = array<i64: 8, 128>}, {transform_indices = @transform_1, window_bounds = array<i64: 8, 8, 128>}]} {
    %c0 = arith.constant 0 : index
    %c0_0 = arith.constant 0 : index
    %0 = vector.load %arg1[%c0, %c0_0] : memref<8x128xf32, #tpu.memory_space<vmem>>, vector<8x128xf32>
    %cst = arith.constant 1.000000e+00 : f32
    %1 = vector.broadcast %cst : f32 to vector<8x128xf32>
    %2 = arith.subf %1, %0 : vector<8x128xf32>
    %3 = tpu.iota {dimensions = array<i32: 1>} : vector<8x128xi32>
    %c1_i32 = arith.constant 1 : i32
    %4 = vector.broadcast %c1_i32 : i32 to vector<8x128xi32>
    %5 = arith.andi %3, %4 : vector<8x128xi32>
    %c0_i32 = arith.constant 0 : i32
    %6 = vector.broadcast %c0_i32 : i32 to vector<8x128xi32>
    %7 = arith.cmpi eq, %5, %6 : vector<8x128xi32>
    %c1_i32_1 = arith.constant 1 : i32
    %8 = tpu.dynamic_rotate %0 by %c1_i32_1 dim 1 : vector<8x128xf32>, i32 -> vector<8x128xf32>
    %c127_i32 = arith.constant 127 : i32
    %9 = tpu.dynamic_rotate %0 by %c127_i32 dim 1 : vector<8x128xf32>, i32 -> vector<8x128xf32>
    %10 = arith.select %7, %9, %8 : vector<8x128xi1>, vector<8x128xf32>
    %cst_2 = arith.constant 1.000000e+00 : f32
    %11 = vector.broadcast %cst_2 : f32 to vector<8x128xf32>
    %12 = arith.subf %11, %10 : vector<8x128xf32>
    %c0_3 = arith.constant 0 : index
    %c0_4 = arith.constant 0 : index
    %c0_5 = arith.constant 0 : index
    %13 = vector.load %arg2[%c0_3, %c0_4, %c0_5] : memref<8x8x128xf32, #tpu.memory_space<vmem>>, vector<1x8x128xf32>
    %14 = vector.shape_cast %13 : vector<1x8x128xf32> to vector<8x128xf32>
    %15 = vector.shape_cast %0 : vector<8x128xf32> to vector<1x8x128xf32>
    tpu.vector_store %arg2[%c0_3, %c0_4, %c0_5], %15 {strides = array<i32>} : memref<8x8x128xf32, #tpu.memory_space<vmem>>, vector<1x8x128xf32>,
    %16 = arith.select %7, %2, %0 : vector<8x128xi1>, vector<8x128xf32>
    %c1 = arith.constant 1 : index
    %c0_6 = arith.constant 0 : index
    %c0_7 = arith.constant 0 : index
    %17 = vector.load %arg2[%c1, %c0_6, %c0_7] : memref<8x8x128xf32, #tpu.memory_space<vmem>>, vector<1x8x128xf32>
    %18 = vector.shape_cast %17 : vector<1x8x128xf32> to vector<8x128xf32>
    %19 = vector.shape_cast %16 : vector<8x128xf32> to vector<1x8x128xf32>
    tpu.vector_store %arg2[%c1, %c0_6, %c0_7], %19 {strides = array<i32>} : memref<8x8x128xf32, #tpu.memory_space<vmem>>, vector<1x8x128xf32>,
    %20 = arith.select %7, %0, %2 : vector<8x128xi1>, vector<8x128xf32>
    %c2 = arith.constant 2 : index
    %c0_8 = arith.constant 0 : index
    %c0_9 = arith.constant 0 : index
    %21 = vector.load %arg2[%c2, %c0_8, %c0_9] : memref<8x8x128xf32, #tpu.memory_space<vmem>>, vector<1x8x128xf32>
    %22 = vector.shape_cast %21 : vector<1x8x128xf32> to vector<8x128xf32>
    %23 = vector.shape_cast %20 : vector<8x128xf32> to vector<1x8x128xf32>
    tpu.vector_store %arg2[%c2, %c0_8, %c0_9], %23 {strides = array<i32>} : memref<8x8x128xf32, #tpu.memory_space<vmem>>, vector<1x8x128xf32>,
    %c3 = arith.constant 3 : index
    %c0_10 = arith.constant 0 : index
    %c0_11 = arith.constant 0 : index
    %24 = vector.load %arg2[%c3, %c0_10, %c0_11] : memref<8x8x128xf32, #tpu.memory_space<vmem>>, vector<1x8x128xf32>
    %25 = vector.shape_cast %24 : vector<1x8x128xf32> to vector<8x128xf32>
    %26 = vector.shape_cast %2 : vector<8x128xf32> to vector<1x8x128xf32>
    tpu.vector_store %arg2[%c3, %c0_10, %c0_11], %26 {strides = array<i32>} : memref<8x8x128xf32, #tpu.memory_space<vmem>>, vector<1x8x128xf32>,
    %c4 = arith.constant 4 : index
    %c0_12 = arith.constant 0 : index
    %c0_13 = arith.constant 0 : index
    %27 = vector.load %arg2[%c4, %c0_12, %c0_13] : memref<8x8x128xf32, #tpu.memory_space<vmem>>, vector<1x8x128xf32>
    %28 = vector.shape_cast %27 : vector<1x8x128xf32> to vector<8x128xf32>
    %29 = vector.shape_cast %10 : vector<8x128xf32> to vector<1x8x128xf32>
    tpu.vector_store %arg2[%c4, %c0_12, %c0_13], %29 {strides = array<i32>} : memref<8x8x128xf32, #tpu.memory_space<vmem>>, vector<1x8x128xf32>,
    %30 = arith.select %7, %12, %10 : vector<8x128xi1>, vector<8x128xf32>
    %c5 = arith.constant 5 : index
    %c0_14 = arith.constant 0 : index
    %c0_15 = arith.constant 0 : index
    %31 = vector.load %arg2[%c5, %c0_14, %c0_15] : memref<8x8x128xf32, #tpu.memory_space<vmem>>, vector<1x8x128xf32>
    %32 = vector.shape_cast %31 : vector<1x8x128xf32> to vector<8x128xf32>
    %33 = vector.shape_cast %30 : vector<8x128xf32> to vector<1x8x128xf32>
    tpu.vector_store %arg2[%c5, %c0_14, %c0_15], %33 {strides = array<i32>} : memref<8x8x128xf32, #tpu.memory_space<vmem>>, vector<1x8x128xf32>,
    %34 = arith.select %7, %10, %12 : vector<8x128xi1>, vector<8x128xf32>
    %c6 = arith.constant 6 : index
    %c0_16 = arith.constant 0 : index
    %c0_17 = arith.constant 0 : index
    %35 = vector.load %arg2[%c6, %c0_16, %c0_17] : memref<8x8x128xf32, #tpu.memory_space<vmem>>, vector<1x8x128xf32>
    %36 = vector.shape_cast %35 : vector<1x8x128xf32> to vector<8x128xf32>
    %37 = vector.shape_cast %34 : vector<8x128xf32> to vector<1x8x128xf32>
    tpu.vector_store %arg2[%c6, %c0_16, %c0_17], %37 {strides = array<i32>} : memref<8x8x128xf32, #tpu.memory_space<vmem>>, vector<1x8x128xf32>,
    %c7 = arith.constant 7 : index
    %c0_18 = arith.constant 0 : index
    %c0_19 = arith.constant 0 : index
    %38 = vector.load %arg2[%c7, %c0_18, %c0_19] : memref<8x8x128xf32, #tpu.memory_space<vmem>>, vector<1x8x128xf32>
    %39 = vector.shape_cast %38 : vector<1x8x128xf32> to vector<8x128xf32>
    %40 = vector.shape_cast %12 : vector<8x128xf32> to vector<1x8x128xf32>
    tpu.vector_store %arg2[%c7, %c0_18, %c0_19], %40 {strides = array<i32>} : memref<8x8x128xf32, #tpu.memory_space<vmem>>, vector<1x8x128xf32>,
    return
  }
  func.func @transform_0(%arg0: i32) -> (i32, i32) {
    %c0_i32 = arith.constant 0 : i32
    %c0_i32_0 = arith.constant 0 : i32
    return %arg0, %c0_i32 : i32, i32
  }
  func.func @transform_1(%arg0: i32) -> (i32, i32, i32) {
    %c0_i32 = arith.constant 0 : i32
    %c0_i32_0 = arith.constant 0 : i32
    %c0_i32_1 = arith.constant 0 : i32
    return %c0_i32, %arg0, %c0_i32_0 : i32, i32, i32
  }
}

</mosaic_0001>

<llo_original>
// kernel: tpu_custom_call.1
$region0: #{tpu_custom_call.1}
  #allocation0 [shape = 'u32[]', space=smem, size = 0x4, offset = 0x4, fixed_abs, tag = 'smem constant byte address 0x4 - core index']
  #allocation1 [shape = 'u32[72,128]{1,0:T(1,128)}', space=vmem, size = 0x9000, scoped, tag = 'internal scratch']
  %s0 = inlined_call_operand.hbm [shape: f32[8,128], index: 0, kind: input, shape index: {}]
  %s1 = inlined_call_operand.hbm [shape: f32[8,8,128], index: 1, kind: output, shape index: {}]
  %s2 = sld [smem:[#allocation0]]
  $region18: #{tpu_custom_call.1} parent=0
    _
  %s4 = ssub.s32 1, %s2
  %s5 = scalar_select 0, %s4, %s2
  $region1: #{tpu_custom_call.1} parent=0
    #allocation2 [shape = 'u8[4096]{0}', space=vmem, size = 0x1000, scoped, tag = 'input window, operand 0, single buffered']
    #allocation3 [shape = 's32[1]{0}', space=sflag, size = 0x4, scoped, tag = 'scoped memory for tpu_custom_call.1']
    #allocation4 [shape = 's32[1]{0}', space=sflag, size = 0x4, scoped, tag = 'scoped memory for tpu_custom_call.1']
    #allocation5 [shape = 'u8[32768]{0}', space=vmem, size = 0x8000, scoped, tag = 'output window, operand 0, single buffered']
    %6 = vsyncpa [#allocation3], 0
    %7 = vsyncpa [#allocation4], 0
    // Predicated region
    $region2: #{tpu_custom_call.1} parent=1 // pred_check
      _
    $region3: #{tpu_custom_call.1} parent=1 // pred_check_branch
      %9 = sbr.rel (0) target = $region5
    $region4: #{tpu_custom_call.1} parent=1 // pred_region
      %11 = vsyncadd [#allocation3], 0
      %s13 = sshll.u32 %s0, 4
      %s14 = int_to_ptr.hbm [resolvable:$true] %s13
      %s15 = sshll.u32 [#allocation2], 4
      %s16 = int_to_ptr.vmem [resolvable:$true] %s15
      %18 = dma.hbm_to_vmem [thread:$0]  %s14, 128, %s16, [#allocation3]
    $region5: #{tpu_custom_call.1} parent=1 // pred_fallthru
      _
    // Predicated region
    $region6: #{tpu_custom_call.1} parent=1 // pred_check
      _
    $region7: #{tpu_custom_call.1} parent=1 // pred_check_branch
      %20 = sbr.rel (0) target = $region9
    $region8: #{tpu_custom_call.1} parent=1 // pred_region
      %22 = dma.done [#allocation3], 128
    $region9: #{tpu_custom_call.1} parent=1 // pred_fallthru
      _
    %v23 = vld [vmem:[#allocation2] sm:$0xff]
    %v24 = vsub.f32 1.0, %v23
    %v25 = vlaneseq
    %v26 = vand.u32 %v25, 127
    %v27 = vand.u32 %v26, 1
    %vm28 = vcmp.eq.s32.totalorder %v27, 0
    %29 = vrot.lane.b32.xlu0 %v23, 1
    %v30 = vpop.permute.xlu0 %29
    %31 = vrot.lane.b32.xlu0 %v23, 127
    %v32 = vpop.permute.xlu0 %31
    %v33 = vsel %vm28, %v32, %v30
    %v34 = vsub.f32 1.0, %v33
    %35 = vst [vmem:[#allocation5] sm:$0xff] %v23
    %v36 = vsel %vm28, %v24, %v23
    %s37 = scalar_lea.vmem [#allocation5], 8
    %38 = vst [vmem:[%s37] sm:$0xff] %v36
    %v39 = vsel %vm28, %v23, %v24
    %s40 = scalar_lea.vmem [#allocation5], 16
    %41 = vst [vmem:[%s40] sm:$0xff] %v39
    %s42 = scalar_lea.vmem [#allocation5], 24
    %43 = vst [vmem:[%s42] sm:$0xff] %v24
    %s44 = scalar_lea.vmem [#allocation5], 32
    %45 = vst [vmem:[%s44] sm:$0xff] %v33
    %v46 = vsel %vm28, %v34, %v30
    %s47 = scalar_lea.vmem [#allocation5], 40
    %48 = vst [vmem:[%s47] sm:$0xff] %v46
    %v49 = vsel %vm28, %v32, %v34
    %s50 = scalar_lea.vmem [#allocation5], 48
    %51 = vst [vmem:[%s50] sm:$0xff] %v49
    %s52 = scalar_lea.vmem [#allocation5], 56
    %53 = vst [vmem:[%s52] sm:$0xff] %v34
    // Predicated region
    $region10: #{tpu_custom_call.1} parent=1 // pred_check
      _
    $region11: #{tpu_custom_call.1} parent=1 // pred_check_branch
      %55 = sbr.rel (0) target = $region13
    $region12: #{tpu_custom_call.1} parent=1 // pred_region
      %57 = vsyncadd [#allocation4], 0
      %s58 = sshll.u32 [#allocation5], 4
      %s59 = int_to_ptr.vmem [resolvable:$true] %s58
      %s60 = sshll.u32 %s1, 4
      %s61 = int_to_ptr.hbm [resolvable:$true] %s60
      %66 = dma.vmem_to_hbm [thread:$0]  %s59, 1024, %s61, [#allocation4], 128, 128, 8
    $region13: #{tpu_custom_call.1} parent=1 // pred_fallthru
      _
    // Predicated region
    $region14: #{tpu_custom_call.1} parent=1 // pred_check
      _
    $region15: #{tpu_custom_call.1} parent=1 // pred_check_branch
      %68 = sbr.rel (0) target = $region17
    $region16: #{tpu_custom_call.1} parent=1 // pred_region
      %70 = dma.done [#allocation4], 1024
    $region17: #{tpu_custom_call.1} parent=1 // pred_fallthru
      _
    %71 = vsyncpa [#allocation3], 1
    %72 = vsyncpa [#allocation4], 1

</llo_original>
